<compile_context>
chip_gen: v7x
topology: tpu7x:2x2x1
jax: 0.10.0
libtpu: 0.0.40
codegen_flags: <defaults>
</compile_context>

<pallas_src>
import jax
import jax.numpy as jnp
from jax import lax
from jax.experimental import pallas as pl
from jax.experimental.pallas import tpu as pltpu


def _shift_lanes(v, offset):
    """Circular lane shift: result[:, p] = v[:, (p + offset) % n]."""
    n = v.shape[-1]
    amt = (-offset) % n          # jnp.roll(v, s)[:, p] == v[:, (p - s) % n]
    if amt == 0:
        return v
    return pltpu.roll(v, amt, axis=1)


def _make_bottleneck_kernel(img_w, compute_dtype):
    """Kernel closure over the image width (for tap offsets) and MXU dtype."""

    def kernel(x_ref, w1_ref, s1_ref, b1_ref, w2_ref, s2_ref, b2_ref,
               w3_ref, s3_ref, b3_ref, mask_ref, o_ref):
        # x_ref:    (1, Cin, HW)     bf16  one batch element, lane-dense
        # w1_ref:   (Wp, Cin)        bf16  1x1 conv1
        # w2_ref:   (Wp, 9*Wp)       bf16  3x3 conv2, flattened (ky, kx, ci)
        # w3_ref:   (Cout, Wp)       bf16  1x1 conv3
        # s*/b*:    (Wp|Cout, 1)     f32   folded BN scale / bias
        # mask_ref: (9, 1, HW)       f32   per-tap halo validity masks
        # o_ref:    (1, Cout, HW)    f32
        x = x_ref[0]                                              # (Cin, HW)

        # ---- conv1 (1x1) -> BN1 -> ReLU: one lane-dense MXU matmul ---------
        acc1 = jnp.dot(w1_ref[...], x, preferred_element_type=jnp.float32)
        y1 = jnp.maximum(acc1 * s1_ref[...] + b1_ref[...], 0.0)   # (Wp, HW) f32

        # ---- conv2 (3x3, pad 1) as a single im2col matmul ------------------
        # Build the (9*Wp, HW) operand from 9 lane-rotated, boundary-masked
        # copies of y1 (values only: no padded scratch / VMEM round trip).
        patches = []
        for ky in range(3):
            for kx in range(3):
                tap = ky * 3 + kx
                off = (ky - 1) * img_w + (kx - 1)
                patches.append(_shift_lanes(y1, off) * mask_ref[tap])
        im2col = jnp.concatenate(patches, axis=0).astype(compute_dtype)
        acc2 = jnp.dot(w2_ref[...], im2col, preferred_element_type=jnp.float32)
        y2 = jnp.maximum(acc2 * s2_ref[...] + b2_ref[...], 0.0)
        y2 = y2.astype(compute_dtype)                             # (Wp, HW)

        # ---- conv3 (1x1) -> BN3 -> +identity -> ReLU ------------------------
        acc3 = jnp.dot(w3_ref[...], y2, preferred_element_type=jnp.float32)
        z = acc3 * s3_ref[...] + b3_ref[...]                      # (Cout, HW)
        out = jnp.maximum(z + x.astype(jnp.float32), 0.0)
        o_ref[0] = out.astype(o_ref.dtype)

    return kernel


def bottleneck_forward(x_nchw, params, eps=1e-5, compute_dtype=jnp.bfloat16):
    """Pallas Bottleneck forward (eval-mode BN). x_nchw: (N, C, H, W) f32."""
    N, Cin, H, W = x_nchw.shape
    (w1, g1, be1, m1, v1,
     w2, g2, be2, m2, v2,
     w3, g3, be3, m3, v3) = params
    width = w1.shape[0]
    Cout = w3.shape[0]
    HW = H * W
    assert Cout == Cin, "downsample=None requires in_channel == out_channel*4"
    assert HW % 128 == 0 and Cin % 8 == 0, "demo wrapper assumes aligned sizes"

    Wp = max(8, ((width + 7) // 8) * 8)     # pad bottleneck width to sublanes
    f32 = jnp.float32

    # ---- fold BN (inference mode) into per-channel scale/bias --------------
    def fold(g, be, m, v):
        s = g / jnp.sqrt(v + eps)
        return s, be - m * s

    s1, b1 = fold(g1, be1, m1, v1)
    s2, b2 = fold(g2, be2, m2, v2)
    s3, b3 = fold(g3, be3, m3, v3)

    def pad_rows(t, rows):
        return jnp.pad(t, ((0, rows - t.shape[0]),) + ((0, 0),) * (t.ndim - 1))

    # ---- weights in matmul form (bf16); padded channels are zero ------------
    w1_m = pad_rows(w1[:, :, 0, 0], Wp).astype(compute_dtype)        # (Wp, Cin)
    w2_t = jnp.transpose(w2, (0, 2, 3, 1))                           # (co,ky,kx,ci)
    w2_t = jnp.pad(w2_t, ((0, Wp - width), (0, 0), (0, 0), (0, Wp - width)))
    w2_m = w2_t.reshape(Wp, 9 * Wp).astype(compute_dtype)            # (Wp, 9*Wp)
    w3_m = jnp.pad(w3[:, :, 0, 0],
                   ((0, 0), (0, Wp - width))).astype(compute_dtype)  # (Cout, Wp)

    s1_m = pad_rows(s1.reshape(width, 1), Wp).astype(f32)
    b1_m = pad_rows(b1.reshape(width, 1), Wp).astype(f32)
    s2_m = pad_rows(s2.reshape(width, 1), Wp).astype(f32)
    b2_m = pad_rows(b2.reshape(width, 1), Wp).astype(f32)
    s3_m = s3.reshape(Cout, 1).astype(f32)
    b3_m = b3.reshape(Cout, 1).astype(f32)

    # ---- halo validity masks for the 9 conv2 taps (hoisted out of kernel) ---
    hh = jnp.arange(H)
    ww = jnp.arange(W)
    masks = []
    for ky in range(3):
        for kx in range(3):
            dy, dx = ky - 1, kx - 1
            row_ok = (hh + dy >= 0) & (hh + dy < H)
            col_ok = (ww + dx >= 0) & (ww + dx < W)
            masks.append((row_ok[:, None] & col_ok[None, :]).reshape(HW))
    mask_arr = jnp.stack(masks, axis=0).astype(f32).reshape(9, 1, HW)

    # ---- lane-dense activations: (N, C, H*W), bf16 in HBM (no spatial pad) --
    x_flat = x_nchw.reshape(N, Cin, HW).astype(compute_dtype)

    kernel = _make_bottleneck_kernel(W, compute_dtype)

    full2 = lambda shape: pl.BlockSpec(shape, lambda n: (0, 0))
    full3 = lambda shape: pl.BlockSpec(shape, lambda n: (0, 0, 0))

    out_flat = pl.pallas_call(
        kernel,
        out_shape=jax.ShapeDtypeStruct((N, Cout, HW), f32),
        grid_spec=pltpu.PrefetchScalarGridSpec(
            num_scalar_prefetch=0,
            grid=(N,),
            in_specs=[
                pl.BlockSpec((1, Cin, HW), lambda n: (n, 0, 0)),   # x
                full2((Wp, Cin)),                                  # w1
                full2((Wp, 1)), full2((Wp, 1)),                    # s1, b1
                full2((Wp, 9 * Wp)),                               # w2
                full2((Wp, 1)), full2((Wp, 1)),                    # s2, b2
                full2((Cout, Wp)),                                 # w3
                full2((Cout, 1)), full2((Cout, 1)),                # s3, b3
                full3((9, 1, HW)),                                 # halo masks
            ],
            out_specs=pl.BlockSpec((1, Cout, HW), lambda n: (n, 0, 0)),
        ),
        compiler_params=pltpu.CompilerParams(
            # "parallel" batch axis keeps both v7x TensorCores busy.
            dimension_semantics=("parallel",)),
    )(x_flat, w1_m, s1_m, b1_m, w2_m, s2_m, b2_m, w3_m, s3_m, b3_m, mask_arr)

    return out_flat.reshape(N, Cout, H, W)


def reference_forward(x_nchw, params, eps=1e-5, compute_dtype=jnp.bfloat16):
    """Pure-JAX eval-mode Bottleneck reference, mirroring the kernel's
    mixed-precision policy (bf16 operands, f32 accumulation/epilogue)."""
    (w1, g1, be1, m1, v1,
     w2, g2, be2, m2, v2,
     w3, g3, be3, m3, v3) = params
    f32 = jnp.float32
    q = lambda t: t.astype(compute_dtype).astype(f32)

    x = jnp.transpose(x_nchw, (0, 2, 3, 1))            # NHWC
    xq = q(x)
    dn = ("NHWC", "HWIO", "NHWC")
    hp = lax.Precision.HIGHEST

    def bn(y, g, b, m, v):
        return (y - m) / jnp.sqrt(v + eps) * g + b

    w1h = q(jnp.transpose(w1, (2, 3, 1, 0)))
    w2h = q(jnp.transpose(w2, (2, 3, 1, 0)))
    w3h = q(jnp.transpose(w3, (2, 3, 1, 0)))

    out = lax.conv_general_dilated(xq, w1h, (1, 1), "VALID",
                                   dimension_numbers=dn, precision=hp)
    out = q(jnp.maximum(bn(out, g1, be1, m1, v1), 0.0))
    out = lax.conv_general_dilated(out, w2h, (1, 1), "SAME",
                                   dimension_numbers=dn, precision=hp)
    out = q(jnp.maximum(bn(out, g2, be2, m2, v2), 0.0))
    out = lax.conv_general_dilated(out, w3h, (1, 1), "VALID",
                                   dimension_numbers=dn, precision=hp)
    out = jnp.maximum(bn(out, g3, be3, m3, v3) + xq, 0.0)
    return jnp.transpose(out, (0, 3, 1, 2))


if __name__ == "__main__":
    # Bottleneck defaults: stride=1, groups=1, width_per_group=64,
    # downsample=None  =>  width = out_channel and in_channel = out_channel*4.
    N, out_channel, H, W = 2, 4, 16, 16
    width = out_channel
    in_channel = out_channel * 4            # 16, so the identity add is valid

    key = jax.random.PRNGKey(0)
    ks = jax.random.split(key, 8)

    x = jax.random.normal(ks[0], (N, in_channel, H, W), dtype=jnp.float32)

    def bn_params(k, c):
        k1, k2, k3, k4 = jax.random.split(k, 4)
        g = 1.0 + 0.1 * jax.random.normal(k1, (c,), dtype=jnp.float32)
        be = 0.1 * jax.random.normal(k2, (c,), dtype=jnp.float32)
        m = 0.1 * jax.random.normal(k3, (c,), dtype=jnp.float32)
        v = jax.random.uniform(k4, (c,), minval=0.5, maxval=1.5,
                               dtype=jnp.float32)
        return g, be, m, v

    w1 = 0.2 * jax.random.normal(ks[1], (width, in_channel, 1, 1), jnp.float32)
    w2 = 0.2 * jax.random.normal(ks[2], (width, width, 3, 3), jnp.float32)
    w3 = 0.2 * jax.random.normal(ks[3], (in_channel, width, 1, 1), jnp.float32)
    g1, be1, m1, v1 = bn_params(ks[4], width)
    g2, be2, m2, v2 = bn_params(ks[5], width)
    g3, be3, m3, v3 = bn_params(ks[6], in_channel)

    params = (w1, g1, be1, m1, v1,
              w2, g2, be2, m2, v2,
              w3, g3, be3, m3, v3)

    out = bottleneck_forward(x, params)
    out = jax.block_until_ready(out)
    ref = reference_forward(x, params)

    assert out.shape == (N, in_channel, H, W)
    assert jnp.allclose(out, ref, atol=2e-3, rtol=2e-3), (
        f"mismatch vs JAX reference: max abs err {jnp.max(jnp.abs(out - ref))}")

    print("KERNEL_OK")
</pallas_src>

<mosaic_0001>
module attributes {stable_mosaic.version = 11 : i64} {
  func.func @kernel(%arg0: i32, %arg1: memref<1x16x256xbf16, #tpu.memory_space<vmem>>, %arg2: memref<8x16xbf16, #tpu.memory_space<vmem>>, %arg3: memref<8x1xf32, #tpu.memory_space<vmem>>, %arg4: memref<8x1xf32, #tpu.memory_space<vmem>>, %arg5: memref<8x72xbf16, #tpu.memory_space<vmem>>, %arg6: memref<8x1xf32, #tpu.memory_space<vmem>>, %arg7: memref<8x1xf32, #tpu.memory_space<vmem>>, %arg8: memref<16x8xbf16, #tpu.memory_space<vmem>>, %arg9: memref<16x1xf32, #tpu.memory_space<vmem>>, %arg10: memref<16x1xf32, #tpu.memory_space<vmem>>, %arg11: memref<9x1x256xf32, #tpu.memory_space<vmem>>, %arg12: memref<1x16x256xf32, #tpu.memory_space<vmem>>) attributes {dimension_semantics = [#tpu.dimension_semantics<parallel>], iteration_bounds = array<i64: 2>, scalar_prefetch = 0 : i64, scratch_operands = 0 : i64, tpu.core_type = #tpu.core_type<tc>, window_params = [{transform_indices = @transform_0, window_bounds = array<i64: 1, 16, 256>}, {pipeline_mode = #tpu.pipeline_mode<synchronous>, transform_indices = @transform_1, window_bounds = array<i64: 8, 16>}, {pipeline_mode = #tpu.pipeline_mode<synchronous>, transform_indices = @transform_2, window_bounds = array<i64: 8, 1>}, {pipeline_mode = #tpu.pipeline_mode<synchronous>, transform_indices = @transform_3, window_bounds = array<i64: 8, 1>}, {pipeline_mode = #tpu.pipeline_mode<synchronous>, transform_indices = @transform_4, window_bounds = array<i64: 8, 72>}, {pipeline_mode = #tpu.pipeline_mode<synchronous>, transform_indices = @transform_5, window_bounds = array<i64: 8, 1>}, {pipeline_mode = #tpu.pipeline_mode<synchronous>, transform_indices = @transform_6, window_bounds = array<i64: 8, 1>}, {pipeline_mode = #tpu.pipeline_mode<synchronous>, transform_indices = @transform_7, window_bounds = array<i64: 16, 8>}, {pipeline_mode = #tpu.pipeline_mode<synchronous>, transform_indices = @transform_8, window_bounds = array<i64: 16, 1>}, {pipeline_mode = #tpu.pipeline_mode<synchronous>, transform_indices = @transform_9, window_bounds = array<i64: 16, 1>}, {pipeline_mode = #tpu.pipeline_mode<synchronous>, transform_indices = @transform_10, window_bounds = array<i64: 9, 1, 256>}, {transform_indices = @transform_11, window_bounds = array<i64: 1, 16, 256>}]} {
    %c0 = arith.constant 0 : index
    %c0_0 = arith.constant 0 : index
    %c0_1 = arith.constant 0 : index
    %0 = vector.load %arg1[%c0, %c0_0, %c0_1] : memref<1x16x256xbf16, #tpu.memory_space<vmem>>, vector<1x16x256xbf16>
    %1 = vector.shape_cast %0 : vector<1x16x256xbf16> to vector<16x256xbf16>
    %c0_2 = arith.constant 0 : index
    %c0_3 = arith.constant 0 : index
    %2 = vector.load %arg2[%c0_2, %c0_3] : memref<8x16xbf16, #tpu.memory_space<vmem>>, vector<8x16xbf16>
    %cst = arith.constant dense<0.000000e+00> : vector<8x256xf32>
    %3 = tpu.matmul %2, %1, %cst {dimension_numbers = #tpu.dot_dimension_numbers<[1], [0], [0], [1], [0, 0, 1, 1], [], []>} : vector<8x16xbf16>, vector<16x256xbf16>, vector<8x256xf32> -> vector<8x256xf32>
    %c0_4 = arith.constant 0 : index
    %c0_5 = arith.constant 0 : index
    %4 = vector.load %arg3[%c0_4, %c0_5] : memref<8x1xf32, #tpu.memory_space<vmem>>, vector<8x1xf32>
    %5 = vector.broadcast %4 : vector<8x1xf32> to vector<8x256xf32>
    %6 = arith.mulf %3, %5 : vector<8x256xf32>
    %c0_6 = arith.constant 0 : index
    %c0_7 = arith.constant 0 : index
    %7 = vector.load %arg4[%c0_6, %c0_7] : memref<8x1xf32, #tpu.memory_space<vmem>>, vector<8x1xf32>
    %8 = vector.broadcast %7 : vector<8x1xf32> to vector<8x256xf32>
    %9 = arith.addf %6, %8 : vector<8x256xf32>
    %cst_8 = arith.constant 0.000000e+00 : f32
    %10 = vector.broadcast %cst_8 : f32 to vector<8x256xf32>
    %11 = arith.maximumf %9, %10 : vector<8x256xf32>
    %c17_i32 = arith.constant 17 : i32
    %12 = tpu.dynamic_rotate %11 by %c17_i32 dim 1 : vector<8x256xf32>, i32 -> vector<8x256xf32>
    %c0_9 = arith.constant 0 : index
    %c0_10 = arith.constant 0 : index
    %c0_11 = arith.constant 0 : index
    %13 = vector.load %arg11[%c0_9, %c0_10, %c0_11] : memref<9x1x256xf32, #tpu.memory_space<vmem>>, vector<1x1x256xf32>
    %14 = vector.shape_cast %13 : vector<1x1x256xf32> to vector<1x256xf32>
    %15 = vector.broadcast %14 : vector<1x256xf32> to vector<8x256xf32>
    %16 = arith.mulf %12, %15 : vector<8x256xf32>
    %c16_i32 = arith.constant 16 : i32
    %17 = tpu.dynamic_rotate %11 by %c16_i32 dim 1 : vector<8x256xf32>, i32 -> vector<8x256xf32>
    %c1 = arith.constant 1 : index
    %c0_12 = arith.constant 0 : index
    %c0_13 = arith.constant 0 : index
    %18 = vector.load %arg11[%c1, %c0_12, %c0_13] : memref<9x1x256xf32, #tpu.memory_space<vmem>>, vector<1x1x256xf32>
    %19 = vector.shape_cast %18 : vector<1x1x256xf32> to vector<1x256xf32>
    %20 = vector.broadcast %19 : vector<1x256xf32> to vector<8x256xf32>
    %21 = arith.mulf %17, %20 : vector<8x256xf32>
    %c15_i32 = arith.constant 15 : i32
    %22 = tpu.dynamic_rotate %11 by %c15_i32 dim 1 : vector<8x256xf32>, i32 -> vector<8x256xf32>
    %c2 = arith.constant 2 : index
    %c0_14 = arith.constant 0 : index
    %c0_15 = arith.constant 0 : index
    %23 = vector.load %arg11[%c2, %c0_14, %c0_15] : memref<9x1x256xf32, #tpu.memory_space<vmem>>, vector<1x1x256xf32>
    %24 = vector.shape_cast %23 : vector<1x1x256xf32> to vector<1x256xf32>
    %25 = vector.broadcast %24 : vector<1x256xf32> to vector<8x256xf32>
    %26 = arith.mulf %22, %25 : vector<8x256xf32>
    %c1_i32 = arith.constant 1 : i32
    %27 = tpu.dynamic_rotate %11 by %c1_i32 dim 1 : vector<8x256xf32>, i32 -> vector<8x256xf32>
    %c3 = arith.constant 3 : index
    %c0_16 = arith.constant 0 : index
    %c0_17 = arith.constant 0 : index
    %28 = vector.load %arg11[%c3, %c0_16, %c0_17] : memref<9x1x256xf32, #tpu.memory_space<vmem>>, vector<1x1x256xf32>
    %29 = vector.shape_cast %28 : vector<1x1x256xf32> to vector<1x256xf32>
    %30 = vector.broadcast %29 : vector<1x256xf32> to vector<8x256xf32>
    %31 = arith.mulf %27, %30 : vector<8x256xf32>
    %c4 = arith.constant 4 : index
    %c0_18 = arith.constant 0 : index
    %c0_19 = arith.constant 0 : index
    %32 = vector.load %arg11[%c4, %c0_18, %c0_19] : memref<9x1x256xf32, #tpu.memory_space<vmem>>, vector<1x1x256xf32>
    %33 = vector.shape_cast %32 : vector<1x1x256xf32> to vector<1x256xf32>
    %34 = vector.broadcast %33 : vector<1x256xf32> to vector<8x256xf32>
    %35 = arith.mulf %11, %34 : vector<8x256xf32>
    %c255_i32 = arith.constant 255 : i32
    %36 = tpu.dynamic_rotate %11 by %c255_i32 dim 1 : vector<8x256xf32>, i32 -> vector<8x256xf32>
    %c5 = arith.constant 5 : index
    %c0_20 = arith.constant 0 : index
    %c0_21 = arith.constant 0 : index
    %37 = vector.load %arg11[%c5, %c0_20, %c0_21] : memref<9x1x256xf32, #tpu.memory_space<vmem>>, vector<1x1x256xf32>
    %38 = vector.shape_cast %37 : vector<1x1x256xf32> to vector<1x256xf32>
    %39 = vector.broadcast %38 : vector<1x256xf32> to vector<8x256xf32>
    %40 = arith.mulf %36, %39 : vector<8x256xf32>
    %c241_i32 = arith.constant 241 : i32
    %41 = tpu.dynamic_rotate %11 by %c241_i32 dim 1 : vector<8x256xf32>, i32 -> vector<8x256xf32>
    %c6 = arith.constant 6 : index
    %c0_22 = arith.constant 0 : index
    %c0_23 = arith.constant 0 : index
    %42 = vector.load %arg11[%c6, %c0_22, %c0_23] : memref<9x1x256xf32, #tpu.memory_space<vmem>>, vector<1x1x256xf32>
    %43 = vector.shape_cast %42 : vector<1x1x256xf32> to vector<1x256xf32>
    %44 = vector.broadcast %43 : vector<1x256xf32> to vector<8x256xf32>
    %45 = arith.mulf %41, %44 : vector<8x256xf32>
    %c240_i32 = arith.constant 240 : i32
    %46 = tpu.dynamic_rotate %11 by %c240_i32 dim 1 : vector<8x256xf32>, i32 -> vector<8x256xf32>
    %c7 = arith.constant 7 : index
    %c0_24 = arith.constant 0 : index
    %c0_25 = arith.constant 0 : index
    %47 = vector.load %arg11[%c7, %c0_24, %c0_25] : memref<9x1x256xf32, #tpu.memory_space<vmem>>, vector<1x1x256xf32>
    %48 = vector.shape_cast %47 : vector<1x1x256xf32> to vector<1x256xf32>
    %49 = vector.broadcast %48 : vector<1x256xf32> to vector<8x256xf32>
    %50 = arith.mulf %46, %49 : vector<8x256xf32>
    %c239_i32 = arith.constant 239 : i32
    %51 = tpu.dynamic_rotate %11 by %c239_i32 dim 1 : vector<8x256xf32>, i32 -> vector<8x256xf32>
    %c8 = arith.constant 8 : index
    %c0_26 = arith.constant 0 : index
    %c0_27 = arith.constant 0 : index
    %52 = vector.load %arg11[%c8, %c0_26, %c0_27] : memref<9x1x256xf32, #tpu.memory_space<vmem>>, vector<1x1x256xf32>
    %53 = vector.shape_cast %52 : vector<1x1x256xf32> to vector<1x256xf32>
    %54 = vector.broadcast %53 : vector<1x256xf32> to vector<8x256xf32>
    %55 = arith.mulf %51, %54 : vector<8x256xf32>
    %56 = tpu.concatenate %16, %21, %26, %31, %35, %40, %45, %50, %55 in 0 : vector<8x256xf32>, vector<8x256xf32>, vector<8x256xf32>, vector<8x256xf32>, vector<8x256xf32>, vector<8x256xf32>, vector<8x256xf32>, vector<8x256xf32>, vector<8x256xf32> -> vector<72x256xf32>
    %57 = arith.truncf %56 : vector<72x256xf32> to vector<72x256xbf16>
    %c0_28 = arith.constant 0 : index
    %c0_29 = arith.constant 0 : index
    %58 = vector.load %arg5[%c0_28, %c0_29] : memref<8x72xbf16, #tpu.memory_space<vmem>>, vector<8x72xbf16>
    %cst_30 = arith.constant dense<0.000000e+00> : vector<8x256xf32>
    %59 = tpu.matmul %58, %57, %cst_30 {dimension_numbers = #tpu.dot_dimension_numbers<[1], [0], [0], [1], [0, 0, 1, 1], [], []>} : vector<8x72xbf16>, vector<72x256xbf16>, vector<8x256xf32> -> vector<8x256xf32>
    %c0_31 = arith.constant 0 : index
    %c0_32 = arith.constant 0 : index
    %60 = vector.load %arg6[%c0_31, %c0_32] : memref<8x1xf32, #tpu.memory_space<vmem>>, vector<8x1xf32>
    %61 = vector.broadcast %60 : vector<8x1xf32> to vector<8x256xf32>
    %62 = arith.mulf %59, %61 : vector<8x256xf32>
    %c0_33 = arith.constant 0 : index
    %c0_34 = arith.constant 0 : index
    %63 = vector.load %arg7[%c0_33, %c0_34] : memref<8x1xf32, #tpu.memory_space<vmem>>, vector<8x1xf32>
    %64 = vector.broadcast %63 : vector<8x1xf32> to vector<8x256xf32>
    %65 = arith.addf %62, %64 : vector<8x256xf32>
    %cst_35 = arith.constant 0.000000e+00 : f32
    %66 = vector.broadcast %cst_35 : f32 to vector<8x256xf32>
    %67 = arith.maximumf %65, %66 : vector<8x256xf32>
    %68 = arith.truncf %67 : vector<8x256xf32> to vector<8x256xbf16>
    %c0_36 = arith.constant 0 : index
    %c0_37 = arith.constant 0 : index
    %69 = vector.load %arg8[%c0_36, %c0_37] : memref<16x8xbf16, #tpu.memory_space<vmem>>, vector<16x8xbf16>
    %cst_38 = arith.constant dense<0.000000e+00> : vector<16x256xf32>
    %70 = tpu.matmul %69, %68, %cst_38 {dimension_numbers = #tpu.dot_dimension_numbers<[1], [0], [0], [1], [0, 0, 1, 1], [], []>} : vector<16x8xbf16>, vector<8x256xbf16>, vector<16x256xf32> -> vector<16x256xf32>
    %c0_39 = arith.constant 0 : index
    %c0_40 = arith.constant 0 : index
    %71 = vector.load %arg9[%c0_39, %c0_40] : memref<16x1xf32, #tpu.memory_space<vmem>>, vector<16x1xf32>
    %72 = vector.broadcast %71 : vector<16x1xf32> to vector<16x256xf32>
    %73 = arith.mulf %70, %72 : vector<16x256xf32>
    %c0_41 = arith.constant 0 : index
    %c0_42 = arith.constant 0 : index
    %74 = vector.load %arg10[%c0_41, %c0_42] : memref<16x1xf32, #tpu.memory_space<vmem>>, vector<16x1xf32>
    %75 = vector.broadcast %74 : vector<16x1xf32> to vector<16x256xf32>
    %76 = arith.addf %73, %75 : vector<16x256xf32>
    %77 = arith.extf %1 : vector<16x256xbf16> to vector<16x256xf32>
    %78 = arith.addf %76, %77 : vector<16x256xf32>
    %cst_43 = arith.constant 0.000000e+00 : f32
    %79 = vector.broadcast %cst_43 : f32 to vector<16x256xf32>
    %80 = arith.maximumf %78, %79 : vector<16x256xf32>
    %c0_44 = arith.constant 0 : index
    %c0_45 = arith.constant 0 : index
    %c0_46 = arith.constant 0 : index
    %81 = vector.load %arg12[%c0_44, %c0_45, %c0_46] : memref<1x16x256xf32, #tpu.memory_space<vmem>>, vector<1x16x256xf32>
    %82 = vector.shape_cast %81 : vector<1x16x256xf32> to vector<16x256xf32>
    %83 = vector.shape_cast %80 : vector<16x256xf32> to vector<1x16x256xf32>
    tpu.vector_store %arg12[%c0_44, %c0_45, %c0_46], %83 {strides = array<i32>} : memref<1x16x256xf32, #tpu.memory_space<vmem>>, vector<1x16x256xf32>,
    return
  }
  func.func @transform_0(%arg0: i32) -> (i32, i32, i32) {
    %c0_i32 = arith.constant 0 : i32
    %c0_i32_0 = arith.constant 0 : i32
    %c0_i32_1 = arith.constant 0 : i32
    return %arg0, %c0_i32, %c0_i32_0 : i32, i32, i32
  }
  func.func @transform_1(%arg0: i32) -> (i32, i32) {
    %c0_i32 = arith.constant 0 : i32
    %c0_i32_0 = arith.constant 0 : i32
    %c0_i32_1 = arith.constant 0 : i32
    return %c0_i32, %c0_i32_0 : i32, i32
  }
  func.func @transform_2(%arg0: i32) -> (i32, i32) {
    %c0_i32 = arith.constant 0 : i32
    %c0_i32_0 = arith.constant 0 : i32
    %c0_i32_1 = arith.constant 0 : i32
    return %c0_i32, %c0_i32_0 : i32, i32
  }
  func.func @transform_3(%arg0: i32) -> (i32, i32) {
    %c0_i32 = arith.constant 0 : i32
    %c0_i32_0 = arith.constant 0 : i32
    %c0_i32_1 = arith.constant 0 : i32
    return %c0_i32, %c0_i32_0 : i32, i32
  }
  func.func @transform_4(%arg0: i32) -> (i32, i32) {
    %c0_i32 = arith.constant 0 : i32
    %c0_i32_0 = arith.constant 0 : i32
    %c0_i32_1 = arith.constant 0 : i32
    return %c0_i32, %c0_i32_0 : i32, i32
  }
  func.func @transform_5(%arg0: i32) -> (i32, i32) {
    %c0_i32 = arith.constant 0 : i32
    %c0_i32_0 = arith.constant 0 : i32
    %c0_i32_1 = arith.constant 0 : i32
    return %c0_i32, %c0_i32_0 : i32, i32
  }
  func.func @transform_6(%arg0: i32) -> (i32, i32) {
    %c0_i32 = arith.constant 0 : i32
    %c0_i32_0 = arith.constant 0 : i32
    %c0_i32_1 = arith.constant 0 : i32
    return %c0_i32, %c0_i32_0 : i32, i32
  }
  func.func @transform_7(%arg0: i32) -> (i32, i32) {
    %c0_i32 = arith.constant 0 : i32
    %c0_i32_0 = arith.constant 0 : i32
    %c0_i32_1 = arith.constant 0 : i32
    return %c0_i32, %c0_i32_0 : i32, i32
  }
  func.func @transform_8(%arg0: i32) -> (i32, i32) {
    %c0_i32 = arith.constant 0 : i32
    %c0_i32_0 = arith.constant 0 : i32
    %c0_i32_1 = arith.constant 0 : i32
    return %c0_i32, %c0_i32_0 : i32, i32
  }
  func.func @transform_9(%arg0: i32) -> (i32, i32) {
    %c0_i32 = arith.constant 0 : i32
    %c0_i32_0 = arith.constant 0 : i32
    %c0_i32_1 = arith.constant 0 : i32
    return %c0_i32, %c0_i32_0 : i32, i32
  }
  func.func @transform_10(%arg0: i32) -> (i32, i32, i32) {
    %c0_i32 = arith.constant 0 : i32
    %c0_i32_0 = arith.constant 0 : i32
    %c0_i32_1 = arith.constant 0 : i32
    %c0_i32_2 = arith.constant 0 : i32
    return %c0_i32, %c0_i32_0, %c0_i32_1 : i32, i32, i32
  }
  func.func @transform_11(%arg0: i32) -> (i32, i32, i32) {
    %c0_i32 = arith.constant 0 : i32
    %c0_i32_0 = arith.constant 0 : i32
    %c0_i32_1 = arith.constant 0 : i32
    return %arg0, %c0_i32, %c0_i32_0 : i32, i32, i32
  }
}

</mosaic_0001>

<llo_original>
// kernel: tpu_custom_call.1
$region0: #{tpu_custom_call.1}
  #allocation0 [shape = 'u32[]', space=smem, size = 0x4, offset = 0x4, fixed_abs, tag = 'smem constant byte address 0x4 - core index']
  #allocation1 [shape = 'u32[144,128]{1,0:T(1,128)}', space=vmem, size = 0x12000, scoped, tag = 'internal scratch']
  %s0 = inlined_call_operand.vmem [shape: bf16[2,16,256], index: 0, kind: input, shape index: {}]
  %s1 = inlined_call_operand.vmem [shape: bf16[8,16], index: 1, kind: input, shape index: {}]
  %s2 = inlined_call_operand.vmem [shape: f32[8,1], index: 2, kind: input, shape index: {}]
  %s3 = inlined_call_operand.vmem [shape: f32[8,1], index: 3, kind: input, shape index: {}]
  %s4 = inlined_call_operand.vmem [shape: bf16[8,72], index: 4, kind: input, shape index: {}]
  %s5 = inlined_call_operand.vmem [shape: f32[8,1], index: 5, kind: input, shape index: {}]
  %s6 = inlined_call_operand.vmem [shape: f32[8,1], index: 6, kind: input, shape index: {}]
  %s7 = inlined_call_operand.vmem [shape: bf16[16,8], index: 7, kind: input, shape index: {}]
  %s8 = inlined_call_operand.vmem [shape: f32[16,1], index: 8, kind: input, shape index: {}]
  %s9 = inlined_call_operand.vmem [shape: f32[16,1], index: 9, kind: input, shape index: {}]
  %s10 = inlined_call_operand.vmem [shape: f32[9,1,256], index: 10, kind: input, shape index: {}]
  %s11 = inlined_call_operand.hbm [shape: f32[2,16,256], index: 11, kind: output, shape index: {}]
  %s12 = sld [smem:[#allocation0]]
  $region77: #{tpu_custom_call.1} parent=0
    _
  %s14 = ssub.s32 1, %s12
  %s15 = scalar_select 0, %s14, %s12
  $region1: #{tpu_custom_call.1} parent=0
    #allocation2 [shape = 'u8[32768]{0}', space=vmem, size = 0x8000, scoped, tag = 'output window, operand 0']
    #allocation3 [shape = 's32[2]{0}', space=sflag, size = 0x8, scoped, tag = 'scoped memory for tpu_custom_call.1']
    %16 = vsyncpa [#allocation3], 0
    %s17 = scalar_lea.sflag [#allocation3], 1
    %18 = vsyncpa %s17, 0
    loop: start=0, step=1, limit=4
    $region2: #{tpu_custom_call.1} parent=1 // loop_pre_header
      _
    $region3: #{tpu_custom_call.1} parent=1 // loop_header
      %s20 = sphi 0, %s24
      %p21 = scmp.ge.s32.totalorder %s20, 4
      %s30 = sphi 0, %s32
      %s33 = sphi 0, %s30
      %s34 = sphi 0, %s33
      %s50 = sphi 0, %s34
      %s54 = sphi 0, %s54
      %s56 = sphi 0, %s54
      %s57 = sphi 0, %s56
      %s71 = sphi 0, %s57
      %s75 = sphi 0, %s75
      %s77 = sphi 0, %s75
      %s78 = sphi 0, %s77
      %s92 = sphi 0, %s78
      %s96 = sphi 0, %s96
      %s98 = sphi 0, %s96
      %s99 = sphi 0, %s98
      %s113 = sphi 0, %s99
      %s117 = sphi 0, %s117
      %s119 = sphi 0, %s117
      %s120 = sphi 0, %s119
      %s134 = sphi 0, %s120
      %s138 = sphi 0, %s138
      %s140 = sphi 0, %s138
      %s141 = sphi 0, %s140
      %s155 = sphi 0, %s141
      %s159 = sphi 0, %s159
      %s161 = sphi 0, %s159
      %s162 = sphi 0, %s161
      %s176 = sphi 0, %s162
      %s180 = sphi 0, %s180
      %s182 = sphi 0, %s180
      %s183 = sphi 0, %s182
      %s197 = sphi 0, %s183
      %s201 = sphi 0, %s201
      %s203 = sphi 0, %s201
      %s204 = sphi 0, %s203
      %s218 = sphi 0, %s204
      %s222 = sphi 0, %s222
      %s224 = sphi 0, %s222
      %s225 = sphi 0, %s224
      %s239 = sphi 0, %s225
      %s243 = sphi 0, %s243
      %s245 = sphi 0, %s243
      %s246 = sphi 0, %s245
      %s260 = sphi 0, %s246
      %s266 = sphi 0, %s268
      %s269 = sphi 0, %s266
      %s270 = sphi 0, %s269
      %s286 = sphi 0, %s270
    $region4: #{tpu_custom_call.1} parent=1 // loop_header_branch
      %23 = sbr.rel (%p21) target = $region8
    $region5: #{tpu_custom_call.1} parent=1 // loop_body
      %s25 = ssub.s32 %s20, 1
      %s26 = ssub.s32 %s20, 2
      %s27 = sadd.s32 %s20, 1
      %s28 = ssub.s32 %s20, %s27
      %p29 = scmp.eq.s32.totalorder %s28, 0
      %s31 = sadd.s32 %s30, 1
      %s32 = scalar_select %p29, %s30, %s31
      %p35 = pneg %p29
      %p36 = scmp.eq.s32.totalorder %s20, 1
      %p37 = por %p35, %p36
      %p38 = scmp.ne.s32.totalorder %s30, %s33
      %p39 = scmp.eq.s32.totalorder %s20, 0
      %p40 = por %p38, %p39
      %p41 = scmp.ne.s32.totalorder %s30, %s33
      %p42 = scmp.eq.s32.totalorder %s25, 1
      %p43 = por %p41, %p42
      %p44 = scmp.ne.s32.totalorder %s33, %s34
      %p45 = scmp.eq.s32.totalorder %s25, 0
      %p46 = por %p44, %p45
      %p47 = scmp.ne.s32.totalorder %s33, %s34
      %p48 = scmp.eq.s32.totalorder %s26, 1
      %p49 = por %p47, %p48
      %p51 = scmp.ne.s32.totalorder %s34, %s50
      %p52 = scmp.eq.s32.totalorder %s26, 0
      %p53 = por %p51, %p52
      %s55 = sadd.s32 %s54, 1
      %p58 = scmp.eq.s32.totalorder %s20, 1
      %p59 = scmp.ne.s32.totalorder %s54, %s56
      %p60 = scmp.eq.s32.totalorder %s20, 0
      %p61 = por %p59, %p60
      %p62 = scmp.ne.s32.totalorder %s54, %s56
      %p63 = scmp.eq.s32.totalorder %s25, 1
      %p64 = por %p62, %p63
      %p65 = scmp.ne.s32.totalorder %s56, %s57
      %p66 = scmp.eq.s32.totalorder %s25, 0
      %p67 = por %p65, %p66
      %p68 = scmp.ne.s32.totalorder %s56, %s57
      %p69 = scmp.eq.s32.totalorder %s26, 1
      %p70 = por %p68, %p69
      %p72 = scmp.ne.s32.totalorder %s57, %s71
      %p73 = scmp.eq.s32.totalorder %s26, 0
      %p74 = por %p72, %p73
      %s76 = sadd.s32 %s75, 1
      %p79 = scmp.eq.s32.totalorder %s20, 1
      %p80 = scmp.ne.s32.totalorder %s75, %s77
      %p81 = scmp.eq.s32.totalorder %s20, 0
      %p82 = por %p80, %p81
      %p83 = scmp.ne.s32.totalorder %s75, %s77
      %p84 = scmp.eq.s32.totalorder %s25, 1
      %p85 = por %p83, %p84
      %p86 = scmp.ne.s32.totalorder %s77, %s78
      %p87 = scmp.eq.s32.totalorder %s25, 0
      %p88 = por %p86, %p87
      %p89 = scmp.ne.s32.totalorder %s77, %s78
      %p90 = scmp.eq.s32.totalorder %s26, 1
      %p91 = por %p89, %p90
      %p93 = scmp.ne.s32.totalorder %s78, %s92
      %p94 = scmp.eq.s32.totalorder %s26, 0
      %p95 = por %p93, %p94
      %s97 = sadd.s32 %s96, 1
      %p100 = scmp.eq.s32.totalorder %s20, 1
      %p101 = scmp.ne.s32.totalorder %s96, %s98
      %p102 = scmp.eq.s32.totalorder %s20, 0
      %p103 = por %p101, %p102
      %p104 = scmp.ne.s32.totalorder %s96, %s98
      %p105 = scmp.eq.s32.totalorder %s25, 1
      %p106 = por %p104, %p105
      %p107 = scmp.ne.s32.totalorder %s98, %s99
      %p108 = scmp.eq.s32.totalorder %s25, 0
      %p109 = por %p107, %p108
      %p110 = scmp.ne.s32.totalorder %s98, %s99
      %p111 = scmp.eq.s32.totalorder %s26, 1
      %p112 = por %p110, %p111
      %p114 = scmp.ne.s32.totalorder %s99, %s113
      %p115 = scmp.eq.s32.totalorder %s26, 0
      %p116 = por %p114, %p115
      %s118 = sadd.s32 %s117, 1
      %p121 = scmp.eq.s32.totalorder %s20, 1
      %p122 = scmp.ne.s32.totalorder %s117, %s119
      %p123 = scmp.eq.s32.totalorder %s20, 0
      %p124 = por %p122, %p123
      %p125 = scmp.ne.s32.totalorder %s117, %s119
      %p126 = scmp.eq.s32.totalorder %s25, 1
      %p127 = por %p125, %p126
      %p128 = scmp.ne.s32.totalorder %s119, %s120
      %p129 = scmp.eq.s32.totalorder %s25, 0
      %p130 = por %p128, %p129
      %p131 = scmp.ne.s32.totalorder %s119, %s120
      %p132 = scmp.eq.s32.totalorder %s26, 1
      %p133 = por %p131, %p132
      %p135 = scmp.ne.s32.totalorder %s120, %s134
      %p136 = scmp.eq.s32.totalorder %s26, 0
      %p137 = por %p135, %p136
      %s139 = sadd.s32 %s138, 1
      %p142 = scmp.eq.s32.totalorder %s20, 1
      %p143 = scmp.ne.s32.totalorder %s138, %s140
      %p144 = scmp.eq.s32.totalorder %s20, 0
      %p145 = por %p143, %p144
      %p146 = scmp.ne.s32.totalorder %s138, %s140
      %p147 = scmp.eq.s32.totalorder %s25, 1
      %p148 = por %p146, %p147
      %p149 = scmp.ne.s32.totalorder %s140, %s141
      %p150 = scmp.eq.s32.totalorder %s25, 0
      %p151 = por %p149, %p150
      %p152 = scmp.ne.s32.totalorder %s140, %s141
      %p153 = scmp.eq.s32.totalorder %s26, 1
      %p154 = por %p152, %p153
      %p156 = scmp.ne.s32.totalorder %s141, %s155
      %p157 = scmp.eq.s32.totalorder %s26, 0
      %p158 = por %p156, %p157
      %s160 = sadd.s32 %s159, 1
      %p163 = scmp.eq.s32.totalorder %s20, 1
      %p164 = scmp.ne.s32.totalorder %s159, %s161
      %p165 = scmp.eq.s32.totalorder %s20, 0
      %p166 = por %p164, %p165
      %p167 = scmp.ne.s32.totalorder %s159, %s161
      %p168 = scmp.eq.s32.totalorder %s25, 1
      %p169 = por %p167, %p168
      %p170 = scmp.ne.s32.totalorder %s161, %s162
      %p171 = scmp.eq.s32.totalorder %s25, 0
      %p172 = por %p170, %p171
      %p173 = scmp.ne.s32.totalorder %s161, %s162
      %p174 = scmp.eq.s32.totalorder %s26, 1
      %p175 = por %p173, %p174
      %p177 = scmp.ne.s32.totalorder %s162, %s176
      %p178 = scmp.eq.s32.totalorder %s26, 0
      %p179 = por %p177, %p178
      %s181 = sadd.s32 %s180, 1
      %p184 = scmp.eq.s32.totalorder %s20, 1
      %p185 = scmp.ne.s32.totalorder %s180, %s182
      %p186 = scmp.eq.s32.totalorder %s20, 0
      %p187 = por %p185, %p186
      %p188 = scmp.ne.s32.totalorder %s180, %s182
      %p189 = scmp.eq.s32.totalorder %s25, 1
      %p190 = por %p188, %p189
      %p191 = scmp.ne.s32.totalorder %s182, %s183
      %p192 = scmp.eq.s32.totalorder %s25, 0
      %p193 = por %p191, %p192
      %p194 = scmp.ne.s32.totalorder %s182, %s183
      %p195 = scmp.eq.s32.totalorder %s26, 1
      %p196 = por %p194, %p195
      %p198 = scmp.ne.s32.totalorder %s183, %s197
      %p199 = scmp.eq.s32.totalorder %s26, 0
      %p200 = por %p198, %p199
      %s202 = sadd.s32 %s201, 1
      %p205 = scmp.eq.s32.totalorder %s20, 1
      %p206 = scmp.ne.s32.totalorder %s201, %s203
      %p207 = scmp.eq.s32.totalorder %s20, 0
      %p208 = por %p206, %p207
      %p209 = scmp.ne.s32.totalorder %s201, %s203
      %p210 = scmp.eq.s32.totalorder %s25, 1
      %p211 = por %p209, %p210
      %p212 = scmp.ne.s32.totalorder %s203, %s204
      %p213 = scmp.eq.s32.totalorder %s25, 0
      %p214 = por %p212, %p213
      %p215 = scmp.ne.s32.totalorder %s203, %s204
      %p216 = scmp.eq.s32.totalorder %s26, 1
      %p217 = por %p215, %p216
      %p219 = scmp.ne.s32.totalorder %s204, %s218
      %p220 = scmp.eq.s32.totalorder %s26, 0
      %p221 = por %p219, %p220
      %s223 = sadd.s32 %s222, 1
      %p226 = scmp.eq.s32.totalorder %s20, 1
      %p227 = scmp.ne.s32.totalorder %s222, %s224
      %p228 = scmp.eq.s32.totalorder %s20, 0
      %p229 = por %p227, %p228
      %p230 = scmp.ne.s32.totalorder %s222, %s224
      %p231 = scmp.eq.s32.totalorder %s25, 1
      %p232 = por %p230, %p231
      %p233 = scmp.ne.s32.totalorder %s224, %s225
      %p234 = scmp.eq.s32.totalorder %s25, 0
      %p235 = por %p233, %p234
      %p236 = scmp.ne.s32.totalorder %s224, %s225
      %p237 = scmp.eq.s32.totalorder %s26, 1
      %p238 = por %p236, %p237
      %p240 = scmp.ne.s32.totalorder %s225, %s239
      %p241 = scmp.eq.s32.totalorder %s26, 0
      %p242 = por %p240, %p241
      %s244 = sadd.s32 %s243, 1
      %p247 = scmp.eq.s32.totalorder %s20, 1
      %p248 = scmp.ne.s32.totalorder %s243, %s245
      %p249 = scmp.eq.s32.totalorder %s20, 0
      %p250 = por %p248, %p249
      %p251 = scmp.ne.s32.totalorder %s243, %s245
      %p252 = scmp.eq.s32.totalorder %s25, 1
      %p253 = por %p251, %p252
      %p254 = scmp.ne.s32.totalorder %s245, %s246
      %p255 = scmp.eq.s32.totalorder %s25, 0
      %p256 = por %p254, %p255
      %p257 = scmp.ne.s32.totalorder %s245, %s246
      %p258 = scmp.eq.s32.totalorder %s26, 1
      %p259 = por %p257, %p258
      %p261 = scmp.ne.s32.totalorder %s246, %s260
      %p262 = scmp.eq.s32.totalorder %s26, 0
      %p263 = por %p261, %p262
      %s264 = ssub.s32 %s20, %s27
      %p265 = scmp.eq.s32.totalorder %s264, 0
      %s267 = sadd.s32 %s266, 1
      %s268 = scalar_select %p265, %s266, %s267
      %p271 = pneg %p265
      %p272 = scmp.eq.s32.totalorder %s20, 1
      %p273 = por %p271, %p272
      %p274 = scmp.ne.s32.totalorder %s266, %s269
      %p275 = scmp.eq.s32.totalorder %s20, 0
      %p276 = por %p274, %p275
      %p277 = scmp.ne.s32.totalorder %s266, %s269
      %p278 = scmp.eq.s32.totalorder %s25, 1
      %p279 = por %p277, %p278
      %p280 = scmp.ne.s32.totalorder %s269, %s270
      %p281 = scmp.eq.s32.totalorder %s25, 0
      %p282 = por %p280, %p281
      %p283 = scmp.ne.s32.totalorder %s269, %s270
      %p284 = scmp.eq.s32.totalorder %s26, 1
      %p285 = por %p283, %p284
      %p287 = scmp.ne.s32.totalorder %s270, %s286
      %p288 = scmp.eq.s32.totalorder %s26, 0
      %p289 = por %p287, %p288
      %p290 = scmp.le.s32.totalorder 1, %s20
      %p291 = scmp.lt.s32.totalorder %s20, 3
      %p292 = pnand %p290, %p291
      %p293 = pneg %p292
      // Predicated region
      $region9: #{tpu_custom_call.1} parent=5 // pred_check
        _
      $region10: #{tpu_custom_call.1} parent=5 // pred_check_branch
        %295 = sbr.rel (%p292) target = $region12
      $region11: #{tpu_custom_call.1} parent=5 // pred_region
        %s296 = ssub.s32 %s20, 1
        // Predicated region
        $region13: #{tpu_custom_call.1} parent=11 // pred_check
          %p297 = pneg %p67
        $region14: #{tpu_custom_call.1} parent=11 // pred_check_branch
          %299 = sbr.rel (%p297) target = $region16
        $region15: #{tpu_custom_call.1} parent=11 // pred_region
          _
        $region16: #{tpu_custom_call.1} parent=11 // pred_fallthru
          _
        // Predicated region
        $region17: #{tpu_custom_call.1} parent=11 // pred_check
          %p300 = pneg %p88
        $region18: #{tpu_custom_call.1} parent=11 // pred_check_branch
          %302 = sbr.rel (%p300) target = $region20
        $region19: #{tpu_custom_call.1} parent=11 // pred_region
          _
        $region20: #{tpu_custom_call.1} parent=11 // pred_fallthru
          _
        // Predicated region
        $region21: #{tpu_custom_call.1} parent=11 // pred_check
          %p303 = pneg %p109
        $region22: #{tpu_custom_call.1} parent=11 // pred_check_branch
          %305 = sbr.rel (%p303) target = $region24
        $region23: #{tpu_custom_call.1} parent=11 // pred_region
          _
        $region24: #{tpu_custom_call.1} parent=11 // pred_fallthru
          _
        // Predicated region
        $region25: #{tpu_custom_call.1} parent=11 // pred_check
          %p306 = pneg %p130
        $region26: #{tpu_custom_call.1} parent=11 // pred_check_branch
          %308 = sbr.rel (%p306) target = $region28
        $region27: #{tpu_custom_call.1} parent=11 // pred_region
          _
        $region28: #{tpu_custom_call.1} parent=11 // pred_fallthru
          _
        // Predicated region
        $region29: #{tpu_custom_call.1} parent=11 // pred_check
          %p309 = pneg %p151
        $region30: #{tpu_custom_call.1} parent=11 // pred_check_branch
          %311 = sbr.rel (%p309) target = $region32
        $region31: #{tpu_custom_call.1} parent=11 // pred_region
          _
        $region32: #{tpu_custom_call.1} parent=11 // pred_fallthru
          _
        // Predicated region
        $region33: #{tpu_custom_call.1} parent=11 // pred_check
          %p312 = pneg %p172
        $region34: #{tpu_custom_call.1} parent=11 // pred_check_branch
          %314 = sbr.rel (%p312) target = $region36
        $region35: #{tpu_custom_call.1} parent=11 // pred_region
          _
        $region36: #{tpu_custom_call.1} parent=11 // pred_fallthru
          _
        // Predicated region
        $region37: #{tpu_custom_call.1} parent=11 // pred_check
          %p315 = pneg %p193
        $region38: #{tpu_custom_call.1} parent=11 // pred_check_branch
          %317 = sbr.rel (%p315) target = $region40
        $region39: #{tpu_custom_call.1} parent=11 // pred_region
          _
        $region40: #{tpu_custom_call.1} parent=11 // pred_fallthru
          _
        // Predicated region
        $region41: #{tpu_custom_call.1} parent=11 // pred_check
          %p318 = pneg %p214
        $region42: #{tpu_custom_call.1} parent=11 // pred_check_branch
          %320 = sbr.rel (%p318) target = $region44
        $region43: #{tpu_custom_call.1} parent=11 // pred_region
          _
        $region44: #{tpu_custom_call.1} parent=11 // pred_fallthru
          _
        // Predicated region
        $region45: #{tpu_custom_call.1} parent=11 // pred_check
          %p321 = pneg %p235
        $region46: #{tpu_custom_call.1} parent=11 // pred_check_branch
          %323 = sbr.rel (%p321) target = $region48
        $region47: #{tpu_custom_call.1} parent=11 // pred_region
          _
        $region48: #{tpu_custom_call.1} parent=11 // pred_fallthru
          _
        // Predicated region
        $region49: #{tpu_custom_call.1} parent=11 // pred_check
          %p324 = pneg %p256
        $region50: #{tpu_custom_call.1} parent=11 // pred_check_branch
          %326 = sbr.rel (%p324) target = $region52
        $region51: #{tpu_custom_call.1} parent=11 // pred_region
          _
        $region52: #{tpu_custom_call.1} parent=11 // pred_fallthru
          _
      $region12: #{tpu_custom_call.1} parent=5 // pred_fallthru
        _
      %p327 = scmp.lt.s32.totalorder %s20, 2
      // Predicated region
      $region53: #{tpu_custom_call.1} parent=5 // pred_check
        %p328 = pneg %p327
      $region54: #{tpu_custom_call.1} parent=5 // pred_check_branch
        %330 = sbr.rel (%p328) target = $region56
      $region55: #{tpu_custom_call.1} parent=5 // pred_region
        // Predicated region
        $region57: #{tpu_custom_call.1} parent=55 // pred_check
          %p331 = pneg %p40
        $region58: #{tpu_custom_call.1} parent=55 // pred_check_branch
          %333 = sbr.rel (%p331) target = $region60
        $region59: #{tpu_custom_call.1} parent=55 // pred_region
          %p334 = scmp.lt.s32.totalorder %s20, 1
          %s335 = scalar_select %p334, %s20, 1
          %s336 = smul.addr %s335, 4
          %s337 = smul.addr %s336, 4
          %s338 = scalar_lea.vmem %s0, %s337
        $region60: #{tpu_custom_call.1} parent=55 // pred_fallthru
          _
      $region56: #{tpu_custom_call.1} parent=5 // pred_fallthru
        _
      %p339 = scmp.le.s32.totalorder 1, %s20
      %p340 = scmp.lt.s32.totalorder %s20, 3
      %p341 = pnand %p339, %p340
      %p342 = pneg %p341
      // Predicated region
      $region61: #{tpu_custom_call.1} parent=5 // pred_check
        _
      $region62: #{tpu_custom_call.1} parent=5 // pred_check_branch
        %344 = sbr.rel (%p341) target = $region64
      $region63: #{tpu_custom_call.1} parent=5 // pred_region
        %s345 = ssub.s32 %s20, 1
        %p346 = scmp.lt.s32.totalorder %s25, 1
        %s347 = scalar_select %p346, %s25, 1
        %s348 = smul.addr %s347, 4
        %s349 = smul.addr %s348, 4
        %s350 = scalar_lea.vmem %s0, %s349
        %p351 = pneg %p46
        %p352 = pneg %p43
        %p353 = pneg %p67
        %p354 = pneg %p64
        %p355 = pneg %p88
        %p356 = pneg %p85
        %p357 = pneg %p109
        %p358 = pneg %p106
        %p359 = pneg %p130
        %p360 = pneg %p127
        %p361 = pneg %p151
        %p362 = pneg %p148
        %p363 = pneg %p172
        %p364 = pneg %p169
        %p365 = pneg %p193
        %p366 = pneg %p190
        %p367 = pneg %p214
        %p368 = pneg %p211
        %p369 = pneg %p235
        %p370 = pneg %p232
        %p371 = pneg %p256
        %p372 = pneg %p253
        %p373 = pneg %p282
        %p374 = pneg %p279
        %s375 = sand.u32 %s269, 1
        %s376 = scalar_lea.sflag [#allocation3], %s375
        %s377 = sand.u32 %s269, 1
        %s378 = smul.addr %s377, 32
        %s379 = scalar_lea.vmem [#allocation2], %s378
        %p380 = scmp.lt.s32.totalorder %s25, 1
        %s381 = scalar_select %p380, %s25, 1
        %s382 = smul.addr %s381, 4
        %s383 = smul.addr %s382, 4
        %s384 = scalar_lea.vmem %s0, %s383
        %v386 = vld [vmem:[%s384] sm:$0xff]
        %v387 = vld [vmem:[%s384 + $0x8] sm:$0xff]
        %v388 = vld [vmem:[%s1] sm:$0xf]
        %v391 = vunpack.c.l.b16 %v386
        %v392 = vunpack.c.h.b16 %v386
        %v393 = vunpack.c.l.b16 %v387
        %v394 = vunpack.c.h.b16 %v387
        %v395 = vpack.c.b16 %v393, %v391
        %v396 = vpack.c.b16 %v394, %v392
        %vm399 = vcmask 130048
        %v401 = vsel %vm399, %v388, 0
        %403 = vmatprep.subr.bf16.mxu0 %v396
        %404 = vmatpush1.bf16.msra.mxu0 %v395
        %405 = vmatprep.subr.bf16.mxu0 0
        %406 = vmatpush1.bf16.msra.mxu0 0
        %407 = vmatprep.subr.bf16.mxu0 0
        %408 = vmatpush1.bf16.msra.mxu0 0
        %409 = vmatprep.subr.bf16.mxu0 0
        %410 = vmatpush1.bf16.msra.mxu0 0
        %411 = vmatprep.subr.bf16.mxu0 0
        %412 = vmatpush1.bf16.msra.mxu0 0
        %413 = vmatprep.subr.bf16.mxu0 0
        %414 = vmatpush1.bf16.msra.mxu0 0
        %415 = vmatprep.subr.bf16.mxu0 0
        %416 = vmatpush1.bf16.msra.mxu0 0
        %417 = vmatprep.subr.bf16.mxu0 0
        %418 = vmatpush1.bf16.msra.mxu0 0
        %419 = vmatprep.subr.bf16.mxu0 0
        %420 = vmatpush1.bf16.msra.mxu0 0
        %421 = vmatprep.subr.bf16.mxu0 0
        %422 = vmatpush1.bf16.msra.mxu0 0
        %423 = vmatprep.subr.bf16.mxu0 0
        %424 = vmatpush1.bf16.msra.mxu0 0
        %425 = vmatprep.subr.bf16.mxu0 0
        %426 = vmatpush1.bf16.msra.mxu0 0
        %427 = vmatprep.subr.bf16.mxu0 0
        %428 = vmatpush1.bf16.msra.mxu0 0
        %429 = vmatprep.subr.bf16.mxu0 0
        %430 = vmatpush1.bf16.msra.mxu0 0
        %431 = vmatprep.subr.bf16.mxu0 0
        %432 = vmatpush1.bf16.msra.mxu0 0
        %433 = vmatprep.subr.bf16.mxu0 0
        %434 = vmatpush1.bf16.msra.mxu0 0
        %435 = vmatprep.mubr.bf16.mxu0 0
        %436 = vmatmul.mubr.bf16.gmra.mrb[0].mxu0 %v401
        %v437 = vpop.f32.mrb[0].mxu0
        %v438 = vadd.f32 0.0, %v437
        %v439 = vpop.f32.mrb[0].mxu0
        %v440 = vadd.f32 0.0, %v439
        %v441 = vpop.f32.mrb[0].mxu0
        %v442 = vpop.f32.mrb[0].mxu0
        %443 = vdwg.mxu0
        %v444 = vld [vmem:[%s2] sm:$0xff]
        %446 = vset.pattern.permute.xlu0 0
        %447 = vperm.xlu0 %446, %v444
        %v448 = vpop.permute.xlu0 %447
        %v450 = vmul.f32 %v438, %v448
        %v451 = vmul.f32 %v440, %v448
        %v452 = vld [vmem:[%s3] sm:$0xff]
        %454 = vset.pattern.permute.xlu0 0
        %455 = vperm.xlu0 %454, %v452
        %v456 = vpop.permute.xlu0 %455
        %v458 = vadd.f32 %v450, %v456
        %v459 = vadd.f32 %v451, %v456
        %v460 = vmax.f32 %v458, 0.0
        %v461 = vmax.f32 %v459, 0.0
        %462 = vrot.lane.b32.xlu0 %v460, 17
        %v463 = vpop.permute.xlu0 %462
        %464 = vrot.lane.b32.xlu0 %v461, 17
        %v465 = vpop.permute.xlu0 %464
        %v466 = vlaneseq
        %v467 = vand.u32 %v466, 127
        %vm468 = vcmp.lt.s32.totalorder %v467, 17
        %v469 = vsel %vm468, %v463, %v465
        %v470 = vsel %vm468, %v465, %v463
        %v471 = vld [vmem:[%s10] sm:$0x3]
        %v473 = vlaneseq
        %v474 = vshrl.u32 %v473, 7
        %v475 = vsub.s32 0, %v474
        %v476 = vrot.slane %v471, %v475
        %v477 = vlaneseq
        %v478 = vshrl.u32 %v477, 7
        %v479 = vsub.s32 1, %v478
        %v480 = vrot.slane %v471, %v479
        %v483 = vmul.f32 %v470, %v476
        %v484 = vmul.f32 %v469, %v480
        %485 = vrot.lane.b32.xlu0 %v460, 16
        %v486 = vpop.permute.xlu0 %485
        %487 = vrot.lane.b32.xlu0 %v461, 16
        %v488 = vpop.permute.xlu0 %487
        %vm489 = vcmp.lt.s32.totalorder %v467, 16
        %v490 = vsel %vm489, %v486, %v488
        %v491 = vsel %vm489, %v488, %v486
        %s492 = scalar_lea.vmem %s10, 2
        %v493 = vld [vmem:[%s492] sm:$0x3]
        %v495 = vlaneseq
        %v496 = vshrl.u32 %v495, 7
        %v497 = vsub.s32 0, %v496
        %v498 = vrot.slane %v493, %v497
        %v499 = vlaneseq
        %v500 = vshrl.u32 %v499, 7
        %v501 = vsub.s32 1, %v500
        %v502 = vrot.slane %v493, %v501
        %v505 = vmul.f32 %v491, %v498
        %v506 = vmul.f32 %v490, %v502
        %507 = vrot.lane.b32.xlu0 %v460, 15
        %v508 = vpop.permute.xlu0 %507
        %509 = vrot.lane.b32.xlu0 %v461, 15
        %v510 = vpop.permute.xlu0 %509
        %vm511 = vcmp.lt.s32.totalorder %v467, 15
        %v512 = vsel %vm511, %v508, %v510
        %v513 = vsel %vm511, %v510, %v508
        %s514 = scalar_lea.vmem %s10, 4
        %v515 = vld [vmem:[%s514] sm:$0x3]
        %v517 = vlaneseq
        %v518 = vshrl.u32 %v517, 7
        %v519 = vsub.s32 0, %v518
        %v520 = vrot.slane %v515, %v519
        %v521 = vlaneseq
        %v522 = vshrl.u32 %v521, 7
        %v523 = vsub.s32 1, %v522
        %v524 = vrot.slane %v515, %v523
        %v527 = vmul.f32 %v513, %v520
        %v528 = vmul.f32 %v512, %v524
        %529 = vrot.lane.b32.xlu0 %v460, 1
        %v530 = vpop.permute.xlu0 %529
        %531 = vrot.lane.b32.xlu0 %v461, 1
        %v532 = vpop.permute.xlu0 %531
        %vm533 = vcmp.lt.s32.totalorder %v467, 1
        %v534 = vsel %vm533, %v530, %v532
        %v535 = vsel %vm533, %v532, %v530
        %s536 = scalar_lea.vmem %s10, 6
        %v537 = vld [vmem:[%s536] sm:$0x3]
        %v539 = vlaneseq
        %v540 = vshrl.u32 %v539, 7
        %v541 = vsub.s32 0, %v540
        %v542 = vrot.slane %v537, %v541
        %v543 = vlaneseq
        %v544 = vshrl.u32 %v543, 7
        %v545 = vsub.s32 1, %v544
        %v546 = vrot.slane %v537, %v545
        %v549 = vmul.f32 %v535, %v542
        %v550 = vmul.f32 %v534, %v546
        %s551 = scalar_lea.vmem %s10, 8
        %v552 = vld [vmem:[%s551] sm:$0x3]
        %v554 = vlaneseq
        %v555 = vshrl.u32 %v554, 7
        %v556 = vsub.s32 0, %v555
        %v557 = vrot.slane %v552, %v556
        %v558 = vlaneseq
        %v559 = vshrl.u32 %v558, 7
        %v560 = vsub.s32 1, %v559
        %v561 = vrot.slane %v552, %v560
        %v564 = vmul.f32 %v460, %v557
        %v565 = vmul.f32 %v461, %v561
        %566 = vrot.lane.b32.xlu0 %v460, 127
        %v567 = vpop.permute.xlu0 %566
        %568 = vrot.lane.b32.xlu0 %v461, 127
        %v569 = vpop.permute.xlu0 %568
        %vm570 = vcmp.lt.s32.totalorder %v467, 127
        %v571 = vsel %vm570, %v567, %v569
        %v572 = vsel %vm570, %v569, %v567
        %s573 = scalar_lea.vmem %s10, 10
        %v574 = vld [vmem:[%s573] sm:$0x3]
        %v576 = vlaneseq
        %v577 = vshrl.u32 %v576, 7
        %v578 = vsub.s32 0, %v577
        %v579 = vrot.slane %v574, %v578
        %v580 = vlaneseq
        %v581 = vshrl.u32 %v580, 7
        %v582 = vsub.s32 1, %v581
        %v583 = vrot.slane %v574, %v582
        %v586 = vmul.f32 %v571, %v579
        %v587 = vmul.f32 %v572, %v583
        %588 = vrot.lane.b32.xlu0 %v460, 113
        %v589 = vpop.permute.xlu0 %588
        %590 = vrot.lane.b32.xlu0 %v461, 113
        %v591 = vpop.permute.xlu0 %590
        %vm592 = vcmp.lt.s32.totalorder %v467, 113
        %v593 = vsel %vm592, %v589, %v591
        %v594 = vsel %vm592, %v591, %v589
        %s595 = scalar_lea.vmem %s10, 12
        %v596 = vld [vmem:[%s595] sm:$0x3]
        %v598 = vlaneseq
        %v599 = vshrl.u32 %v598, 7
        %v600 = vsub.s32 0, %v599
        %v601 = vrot.slane %v596, %v600
        %v602 = vlaneseq
        %v603 = vshrl.u32 %v602, 7
        %v604 = vsub.s32 1, %v603
        %v605 = vrot.slane %v596, %v604
        %v608 = vmul.f32 %v593, %v601
        %v609 = vmul.f32 %v594, %v605
        %610 = vrot.lane.b32.xlu0 %v460, 112
        %v611 = vpop.permute.xlu0 %610
        %612 = vrot.lane.b32.xlu0 %v461, 112
        %v613 = vpop.permute.xlu0 %612
        %vm614 = vcmp.lt.s32.totalorder %v467, 112
        %v615 = vsel %vm614, %v611, %v613
        %v616 = vsel %vm614, %v613, %v611
        %s617 = scalar_lea.vmem %s10, 14
        %v618 = vld [vmem:[%s617] sm:$0x3]
        %v620 = vlaneseq
        %v621 = vshrl.u32 %v620, 7
        %v622 = vsub.s32 0, %v621
        %v623 = vrot.slane %v618, %v622
        %v624 = vlaneseq
        %v625 = vshrl.u32 %v624, 7
        %v626 = vsub.s32 1, %v625
        %v627 = vrot.slane %v618, %v626
        %v630 = vmul.f32 %v615, %v623
        %v631 = vmul.f32 %v616, %v627
        %632 = vrot.lane.b32.xlu0 %v460, 111
        %v633 = vpop.permute.xlu0 %632
        %634 = vrot.lane.b32.xlu0 %v461, 111
        %v635 = vpop.permute.xlu0 %634
        %vm636 = vcmp.lt.s32.totalorder %v467, 111
        %v637 = vsel %vm636, %v633, %v635
        %v638 = vsel %vm636, %v635, %v633
        %s639 = scalar_lea.vmem %s10, 16
        %v640 = vld [vmem:[%s639] sm:$0x3]
        %v642 = vlaneseq
        %v643 = vshrl.u32 %v642, 7
        %v644 = vsub.s32 0, %v643
        %v645 = vrot.slane %v640, %v644
        %v646 = vlaneseq
        %v647 = vshrl.u32 %v646, 7
        %v648 = vsub.s32 1, %v647
        %v649 = vrot.slane %v640, %v648
        %v652 = vmul.f32 %v637, %v645
        %v653 = vmul.f32 %v638, %v649
        %v654 = vpack.c.bf16 %v505, %v483
        %v655 = vpack.c.bf16 %v506, %v484
        %v656 = vpack.c.bf16 %v549, %v527
        %v657 = vpack.c.bf16 %v550, %v528
        %v658 = vpack.c.bf16 %v586, %v564
        %v659 = vpack.c.bf16 %v587, %v565
        %v660 = vpack.c.bf16 %v630, %v608
        %v661 = vpack.c.bf16 %v631, %v609
        %v662 = vpack.c.bf16 %v652, %v652
        %v663 = vpack.c.bf16 %v653, %v653
        %v664 = vld [vmem:[%s4] sm:$0xf]
        %vm665 = vcmask 588800
        %v667 = vsel %vm665, %v664, 0
        %vm669 = vcmask 1043456
        %v671 = vsel %vm669, %v662, 0
        %v674 = vsel %vm669, %v663, 0
        %676 = vmatprep.subr.bf16.mxu0 %v655
        %677 = vmatpush1.bf16.msra.mxu0 %v654
        %678 = vmatprep.subr.bf16.mxu0 %v657
        %679 = vmatpush1.bf16.msra.mxu0 %v656
        %680 = vmatprep.subr.bf16.mxu0 %v659
        %681 = vmatpush1.bf16.msra.mxu0 %v658
        %682 = vmatprep.subr.bf16.mxu0 %v661
        %683 = vmatpush1.bf16.msra.mxu0 %v660
        %684 = vmatprep.subr.bf16.mxu0 %v674
        %685 = vmatpush1.bf16.msra.mxu0 %v671
        %686 = vmatprep.subr.bf16.mxu0 0
        %687 = vmatpush1.bf16.msra.mxu0 0
        %688 = vmatprep.subr.bf16.mxu0 0
        %689 = vmatpush1.bf16.msra.mxu0 0
        %690 = vmatprep.subr.bf16.mxu0 0
        %691 = vmatpush1.bf16.msra.mxu0 0
        %692 = vmatprep.subr.bf16.mxu0 0
        %693 = vmatpush1.bf16.msra.mxu0 0
        %694 = vmatprep.subr.bf16.mxu0 0
        %695 = vmatpush1.bf16.msra.mxu0 0
        %696 = vmatprep.subr.bf16.mxu0 0
        %697 = vmatpush1.bf16.msra.mxu0 0
        %698 = vmatprep.subr.bf16.mxu0 0
        %699 = vmatpush1.bf16.msra.mxu0 0
        %700 = vmatprep.subr.bf16.mxu0 0
        %701 = vmatpush1.bf16.msra.mxu0 0
        %702 = vmatprep.subr.bf16.mxu0 0
        %703 = vmatpush1.bf16.msra.mxu0 0
        %704 = vmatprep.subr.bf16.mxu0 0
        %705 = vmatpush1.bf16.msra.mxu0 0
        %706 = vmatprep.subr.bf16.mxu0 0
        %707 = vmatpush1.bf16.msra.mxu0 0
        %708 = vmatprep.mubr.bf16.mxu0 0
        %709 = vmatmul.mubr.bf16.gmra.mrb[0].mxu0 %v667
        %v710 = vpop.f32.mrb[0].mxu0
        %v711 = vadd.f32 0.0, %v710
        %v712 = vpop.f32.mrb[0].mxu0
        %v713 = vadd.f32 0.0, %v712
        %v714 = vpop.f32.mrb[0].mxu0
        %v715 = vpop.f32.mrb[0].mxu0
        %716 = vdwg.mxu0
        %v717 = vld [vmem:[%s5] sm:$0xff]
        %719 = vset.pattern.permute.xlu0 0
        %720 = vperm.xlu0 %719, %v717
        %v721 = vpop.permute.xlu0 %720
        %v723 = vmul.f32 %v711, %v721
        %v724 = vmul.f32 %v713, %v721
        %v725 = vld [vmem:[%s6] sm:$0xff]
        %727 = vset.pattern.permute.xlu0 0
        %728 = vperm.xlu0 %727, %v725
        %v729 = vpop.permute.xlu0 %728
        %v731 = vadd.f32 %v723, %v729
        %v732 = vadd.f32 %v724, %v729
        %v733 = vmax.f32 %v731, 0.0
        %v734 = vmax.f32 %v732, 0.0
        %v735 = vpack.c.bf16 %v733, %v733
        %v736 = vpack.c.bf16 %v734, %v734
        %v737 = vld [vmem:[%s7] sm:$0xf]
        %v738 = vld [vmem:[%s7 + $0x4] sm:$0xf]
        %v741 = vunpack.c.l.b16 %v737
        %v742 = vunpack.c.l.b16 %v738
        %v743 = vpack.c.b16 %v742, %v741
        %vm744 = vcmask 64512
        %v746 = vsel %vm744, %v743, 0
        %v749 = vsel %vm669, %v735, 0
        %v752 = vsel %vm669, %v736, 0
        %754 = vmatprep.subr.bf16.mxu0 %v752
        %755 = vmatpush1.bf16.msra.mxu0 %v749
        %756 = vmatprep.subr.bf16.mxu0 0
        %757 = vmatpush1.bf16.msra.mxu0 0
        %758 = vmatprep.subr.bf16.mxu0 0
        %759 = vmatpush1.bf16.msra.mxu0 0
        %760 = vmatprep.subr.bf16.mxu0 0
        %761 = vmatpush1.bf16.msra.mxu0 0
        %762 = vmatprep.subr.bf16.mxu0 0
        %763 = vmatpush1.bf16.msra.mxu0 0
        %764 = vmatprep.subr.bf16.mxu0 0
        %765 = vmatpush1.bf16.msra.mxu0 0
        %766 = vmatprep.subr.bf16.mxu0 0
        %767 = vmatpush1.bf16.msra.mxu0 0
        %768 = vmatprep.subr.bf16.mxu0 0
        %769 = vmatpush1.bf16.msra.mxu0 0
        %770 = vmatprep.subr.bf16.mxu0 0
        %771 = vmatpush1.bf16.msra.mxu0 0
        %772 = vmatprep.subr.bf16.mxu0 0
        %773 = vmatpush1.bf16.msra.mxu0 0
        %774 = vmatprep.subr.bf16.mxu0 0
        %775 = vmatpush1.bf16.msra.mxu0 0
        %776 = vmatprep.subr.bf16.mxu0 0
        %777 = vmatpush1.bf16.msra.mxu0 0
        %778 = vmatprep.subr.bf16.mxu0 0
        %779 = vmatpush1.bf16.msra.mxu0 0
        %780 = vmatprep.subr.bf16.mxu0 0
        %781 = vmatpush1.bf16.msra.mxu0 0
        %782 = vmatprep.subr.bf16.mxu0 0
        %783 = vmatpush1.bf16.msra.mxu0 0
        %784 = vmatprep.subr.bf16.mxu0 0
        %785 = vmatpush1.bf16.msra.mxu0 0
        %786 = vmatprep.mubr.bf16.mxu0 0
        %787 = vmatmul.mubr.bf16.gmra.mrb[0].mxu0 %v746
        %v788 = vpop.f32.mrb[0].mxu0
        %v789 = vadd.f32 0.0, %v788
        %v790 = vpop.f32.mrb[0].mxu0
        %v791 = vadd.f32 0.0, %v790
        %v792 = vpop.f32.mrb[0].mxu0
        %v793 = vadd.f32 0.0, %v792
        %v794 = vpop.f32.mrb[0].mxu0
        %v795 = vadd.f32 0.0, %v794
        %796 = vdwg.mxu0
        %v797 = vld [vmem:[%s8] sm:$0xff]
        %v798 = vld [vmem:[%s8 + $0x8] sm:$0xff]
        %800 = vset.pattern.permute.xlu0 0
        %801 = vperm.xlu0 %800, %v797
        %v802 = vpop.permute.xlu0 %801
        %805 = vset.pattern.permute.xlu0 0
        %806 = vperm.xlu0 %805, %v798
        %v807 = vpop.permute.xlu0 %806
        %v809 = vmul.f32 %v789, %v802
        %v810 = vmul.f32 %v791, %v802
        %v811 = vmul.f32 %v793, %v807
        %v812 = vmul.f32 %v795, %v807
        %v813 = vld [vmem:[%s9] sm:$0xff]
        %v814 = vld [vmem:[%s9 + $0x8] sm:$0xff]
        %816 = vset.pattern.permute.xlu0 0
        %817 = vperm.xlu0 %816, %v813
        %v818 = vpop.permute.xlu0 %817
        %821 = vset.pattern.permute.xlu0 0
        %822 = vperm.xlu0 %821, %v814
        %v823 = vpop.permute.xlu0 %822
        %v825 = vadd.f32 %v809, %v818
        %v826 = vadd.f32 %v810, %v818
        %v827 = vadd.f32 %v811, %v823
        %v828 = vadd.f32 %v812, %v823
        %v829 = vunpack.c.l.bf16 %v386
        %v830 = vunpack.c.h.bf16 %v386
        %v831 = vunpack.c.l.bf16 %v387
        %v832 = vunpack.c.h.bf16 %v387
        %v833 = vadd.f32 %v825, %v829
        %v834 = vadd.f32 %v826, %v830
        %v835 = vadd.f32 %v827, %v831
        %v836 = vadd.f32 %v828, %v832
        %v837 = vmax.f32 %v833, 0.0
        %v838 = vmax.f32 %v834, 0.0
        %v839 = vmax.f32 %v835, 0.0
        %v840 = vmax.f32 %v836, 0.0
        %841 = vst [vmem:[%s379] sm:$0xff] %v837
        %842 = vst [vmem:[%s379 + $0x8] sm:$0xff] %v838
        %843 = vst [vmem:[%s379 + $0x10] sm:$0xff] %v839
        %844 = vst [vmem:[%s379 + $0x18] sm:$0xff] %v840
        %s845 = sand.u32 %s269, 1
        %s846 = scalar_lea.sflag [#allocation3], %s845
        %s847 = sand.u32 %s269, 1
        %s848 = smul.addr %s847, 32
        %s849 = scalar_lea.vmem [#allocation2], %s848
        // Predicated region
        $region65: #{tpu_custom_call.1} parent=63 // pred_check
          %p850 = pneg %p279
        $region66: #{tpu_custom_call.1} parent=63 // pred_check_branch
          %852 = sbr.rel (%p850) target = $region68
        $region67: #{tpu_custom_call.1} parent=63 // pred_region
          %s854 = ssub.s32 512, 512
          %855 = vsyncadd %s846, %s854
          %s856 = smul.addr %s25, 4
          %s857 = smul.addr %s856, 128
          %s858 = scalar_lea.hbm %s11, %s857
          %s859 = sshll.u32 %s849, 4
          %s860 = int_to_ptr.vmem [resolvable:$true] %s859
          %865 = dma.vmem_to_hbm [thread:$0]  %s860, 512, %s858, %s846, 256, 256, 16
        $region68: #{tpu_custom_call.1} parent=63 // pred_fallthru
          _
      $region64: #{tpu_custom_call.1} parent=5 // pred_fallthru
        _
      %p866 = scmp.le.s32.totalorder 2, %s20
      // Predicated region
      $region69: #{tpu_custom_call.1} parent=5 // pred_check
        %p867 = pneg %p866
      $region70: #{tpu_custom_call.1} parent=5 // pred_check_branch
        %869 = sbr.rel (%p867) target = $region72
      $region71: #{tpu_custom_call.1} parent=5 // pred_region
        %s870 = ssub.s32 %s20, 2
        // Predicated region
        $region73: #{tpu_custom_call.1} parent=71 // pred_check
          %p871 = pneg %p285
        $region74: #{tpu_custom_call.1} parent=71 // pred_check_branch
          %873 = sbr.rel (%p871) target = $region76
        $region75: #{tpu_custom_call.1} parent=71 // pred_region
          %s874 = sand.u32 %s270, 1
          %s875 = scalar_lea.sflag [#allocation3], %s874
          %s876 = sand.u32 %s270, 1
          %s877 = smul.addr %s876, 32
          %s878 = scalar_lea.vmem [#allocation2], %s877
          %879 = dma.done %s875, 512
        $region76: #{tpu_custom_call.1} parent=71 // pred_fallthru
          _
      $region72: #{tpu_custom_call.1} parent=5 // pred_fallthru
        _
    $region6: #{tpu_custom_call.1} parent=1 // loop_footer
      %s24 = sadd.s32 1, %s20
    $region7: #{tpu_custom_call.1} parent=1 // loop_footer_branch
      %19 = sbr.rel target = $region3
    $region8: #{tpu_custom_call.1} parent=1 // loop_exit
      _
    %880 = vsyncpa [#allocation3], 1
    %s881 = scalar_lea.sflag [#allocation3], 1
    %882 = vsyncpa %s881, 1

</llo_original>
